<compile_context>
chip_gen: v7x
topology: tpu7x:2x2x1
jax: 0.10.0
libtpu: 0.0.40
codegen_flags: <defaults>
</compile_context>

<pallas_src>
import functools

import jax
import jax.numpy as jnp
from jax.experimental import pallas as pl
from jax.experimental.pallas import tpu as pltpu

EMBED_DIM = 66
HIDDEN_DIM = 128
NUM_HEADS = 4
FFN_DIM = 64
LN_EPS = 1e-5


def cross_dim_attn_kernel(x_ref, w_comb_ref, b_comb_ref,
                          w_f1_ref, b_f1_ref, w_f2_ref, out_ref):
    x = x_ref[...]                                                     # (tb, E)

    # Fused input_proj + MHA(V, out_proj) over a length-1 sequence + residual.
    # (softmax over a single key == 1, so the pre-LayerNorm block is affine)
    y = jnp.dot(x, w_comb_ref[...],
                preferred_element_type=jnp.float32) + b_comb_ref[...]  # (tb, H)

    # LayerNorm core — biased variance, eps inside sqrt (PyTorch semantics).
    # gamma/beta are folded into w_f1 / b_f1 in the wrapper (exact algebra).
    mean = jnp.mean(y, axis=-1, keepdims=True)
    cen = y - mean
    var = jnp.mean(cen * cen, axis=-1, keepdims=True)
    y_n = cen * jax.lax.rsqrt(var + LN_EPS)

    # FFN: Linear(H->F) [gamma/beta folded] -> ReLU -> Dropout(identity, eval)
    f1 = jnp.dot(y_n, w_f1_ref[...],
                 preferred_element_type=jnp.float32) + b_f1_ref[...]   # (tb, F)
    f1 = jnp.maximum(f1, 0.0)

    # Final Linear(F->1): (tb,F) @ (F,1) on the MXU — no activation transpose.
    # b_f2 is added in the wrapper.
    out_ref[...] = jnp.dot(f1, w_f2_ref[...],
                           preferred_element_type=jnp.float32)         # (tb, 1)


def init_params(key):
    """Deterministic synthetic parameters matching the PyTorch shapes."""
    ks = jax.random.split(key, 8)
    H = HIDDEN_DIM
    p = {
        # nn.Linear(embed_dim, hidden_dim): weight (H, E), bias (H,)
        "w_in": jax.random.normal(ks[0], (H, EMBED_DIM), jnp.float32) * 0.05,
        "b_in": jax.random.normal(ks[1], (H,), jnp.float32) * 0.05,
        # nn.MultiheadAttention: in_proj_weight (3H, H), in_proj_bias (3H,)
        "in_proj_w": jax.random.normal(ks[2], (3 * H, H), jnp.float32) * 0.05,
        "in_proj_b": jax.random.normal(ks[3], (3 * H,), jnp.float32) * 0.05,
        # out_proj: weight (H, H), bias (H,)
        "out_proj_w": jax.random.normal(ks[4], (H, H), jnp.float32) * 0.05,
        "out_proj_b": jnp.zeros((H,), jnp.float32),
        # LayerNorm(hidden_dim)
        "gamma": jnp.ones((H,), jnp.float32),
        "beta": jnp.zeros((H,), jnp.float32),
        # ffn: Linear(H, ffn) and Linear(ffn, 1)
        "w_f1": jax.random.normal(ks[5], (FFN_DIM, H), jnp.float32) * 0.05,
        "b_f1": jax.random.normal(ks[6], (FFN_DIM,), jnp.float32) * 0.05,
        "w_f2": jax.random.normal(ks[7], (1, FFN_DIM), jnp.float32) * 0.05,
        "b_f2": jnp.zeros((1,), jnp.float32),
    }
    return p


@functools.partial(jax.jit, static_argnames=("tb",))
def cross_dimensional_attention(x, params, *, tb=512):
    """Pallas forward. Returns (out (B,1), attn_weights (B,1))."""
    B, E = x.shape
    assert E == EMBED_DIM
    H, F = HIDDEN_DIM, FFN_DIM

    if x.dtype != jnp.float32:          # no-op (no copy) when already f32
        x = x.astype(jnp.float32)

    # --- one-time algebraic fold of the pre-LayerNorm affine block ------------
    # h = x A + b_in ; v = h Bv + bv ; attn = v C + bo ; y = attn + h
    # => y = x (A (Bv C + I)) + (b_in (Bv C + I) + bv C + bo)
    A = params["w_in"].T.astype(jnp.float32)                           # (E, H)
    Bv = params["in_proj_w"][2 * H:3 * H].T.astype(jnp.float32)        # (H, H)
    bv = params["in_proj_b"][2 * H:3 * H].astype(jnp.float32)          # (H,)
    C = params["out_proj_w"].T.astype(jnp.float32)                     # (H, H)
    bo = params["out_proj_b"].astype(jnp.float32)                      # (H,)
    M = Bv @ C + jnp.eye(H, dtype=jnp.float32)                         # (H, H)
    w_comb = A @ M                                                     # (E, H)
    b_comb = (params["b_in"].astype(jnp.float32) @ M + bv @ C + bo).reshape(1, H)

    # --- fold LayerNorm gamma/beta into the first FFN layer (exact) ----------
    #   (z*gamma + beta) @ W + b  ==  z @ (gamma[:,None]*W) + (beta @ W + b)
    gamma = params["gamma"].astype(jnp.float32)                        # (H,)
    beta = params["beta"].astype(jnp.float32)                          # (H,)
    w_f1_t = params["w_f1"].T.astype(jnp.float32)                      # (H, F)
    w_f1 = gamma[:, None] * w_f1_t                                     # (H, F)
    b_f1 = (beta @ w_f1_t + params["b_f1"].astype(jnp.float32)).reshape(1, F)
    w_f2 = params["w_f2"].astype(jnp.float32).reshape(F, 1)            # (F, 1)

    # --- tile selection: big tiles, but keep >= 2 grid steps when possible ----
    tb_eff = tb
    if pl.cdiv(B, tb_eff) < 2 and B > 128:
        # Split the batch so both TensorCores (v7x) get a grid step.
        tb_eff = 128 * pl.cdiv(pl.cdiv(B, 2), 128)
    assert tb_eff % 8 == 0
    n_tiles = pl.cdiv(B, tb_eff)   # ragged last block allowed (rows independent)

    wspec = lambda shape: pl.BlockSpec(shape, lambda i: (0, 0))

    out = pl.pallas_call(
        cross_dim_attn_kernel,
        out_shape=jax.ShapeDtypeStruct((B, 1), jnp.float32),
        grid_spec=pltpu.PrefetchScalarGridSpec(
            num_scalar_prefetch=0,
            grid=(n_tiles,),
            in_specs=[
                pl.BlockSpec((tb_eff, E), lambda i: (i, 0)),  # x (batch-tiled, ragged tail)
                wspec((E, H)), wspec((1, H)),                 # fused pre-LN affine
                wspec((H, F)), wspec((1, F)),                 # ffn.0 (gamma/beta folded in)
                wspec((F, 1)),                                # ffn.3 weight as a column
            ],
            out_specs=pl.BlockSpec((tb_eff, 1), lambda i: (i, 0)),
        ),
        compiler_params=pltpu.CompilerParams(
            dimension_semantics=("parallel",)),
    )(x, w_comb, b_comb, w_f1, b_f1, w_f2)

    # b_f2 folded out of the kernel — added once on the tiny (B,1) result.
    out = out + params["b_f2"].astype(jnp.float32).reshape(1, 1)
    # head-averaged attention weights over a singleton sequence are exactly 1
    attn_w = jnp.ones((B, 1), jnp.float32)
    return out, attn_w


def reference_forward(x, params):
    """Pure-JAX reference of the PyTorch forward (eval mode), unfused."""
    H = HIDDEN_DIM
    h = x @ params["w_in"].T + params["b_in"]
    v = h @ params["in_proj_w"][2 * H:3 * H].T + params["in_proj_b"][2 * H:3 * H]
    attn = v @ params["out_proj_w"].T + params["out_proj_b"]  # softmax over seq=1 == 1
    y = attn + h
    mean = jnp.mean(y, axis=-1, keepdims=True)
    var = jnp.mean((y - mean) ** 2, axis=-1, keepdims=True)
    y_n = (y - mean) / jnp.sqrt(var + LN_EPS) * params["gamma"] + params["beta"]
    f1 = jnp.maximum(y_n @ params["w_f1"].T + params["b_f1"], 0.0)
    out = f1 @ params["w_f2"].T + params["b_f2"]
    return out.reshape(-1, 1), jnp.ones((x.shape[0], 1), jnp.float32)


if __name__ == "__main__":
    key = jax.random.PRNGKey(0)
    k_param, k_x = jax.random.split(key)
    params = init_params(k_param)

    # B not a multiple of the tile: exercises the ragged last block + a 2-step
    # grid (default tb=512 is auto-capped to 128 here so two steps exist).
    B = 200
    x = jax.random.normal(k_x, (B, EMBED_DIM), jnp.float32)

    out, attn_w = cross_dimensional_attention(x, params)
    out = jax.block_until_ready(out)
    attn_w = jax.block_until_ready(attn_w)

    ref_out, ref_attn = reference_forward(x, params)
    assert out.shape == (B, 1) and attn_w.shape == (B, 1)
    assert jnp.allclose(out, ref_out, atol=1e-4, rtol=1e-4)
    assert jnp.allclose(attn_w, ref_attn)

    print("KERNEL_OK")
</pallas_src>

<mosaic_0001>
module attributes {stable_mosaic.version = 11 : i64} {
  func.func @cross_dim_attn_kernel(%arg0: i32, %arg1: memref<128x66xf32, #tpu.memory_space<vmem>>, %arg2: memref<66x128xf32, #tpu.memory_space<vmem>>, %arg3: memref<1x128xf32, #tpu.memory_space<vmem>>, %arg4: memref<128x64xf32, #tpu.memory_space<vmem>>, %arg5: memref<1x64xf32, #tpu.memory_space<vmem>>, %arg6: memref<64x1xf32, #tpu.memory_space<vmem>>, %arg7: memref<128x1xf32, #tpu.memory_space<vmem>>) attributes {dimension_semantics = [#tpu.dimension_semantics<parallel>], iteration_bounds = array<i64: 2>, scalar_prefetch = 0 : i64, scratch_operands = 0 : i64, tpu.core_type = #tpu.core_type<tc>, window_params = [{transform_indices = @transform_0, window_bounds = array<i64: 128, 66>}, {pipeline_mode = #tpu.pipeline_mode<synchronous>, transform_indices = @transform_1, window_bounds = array<i64: 66, 128>}, {pipeline_mode = #tpu.pipeline_mode<synchronous>, transform_indices = @transform_2, window_bounds = array<i64: 1, 128>}, {pipeline_mode = #tpu.pipeline_mode<synchronous>, transform_indices = @transform_3, window_bounds = array<i64: 128, 64>}, {pipeline_mode = #tpu.pipeline_mode<synchronous>, transform_indices = @transform_4, window_bounds = array<i64: 1, 64>}, {pipeline_mode = #tpu.pipeline_mode<synchronous>, transform_indices = @transform_5, window_bounds = array<i64: 64, 1>}, {transform_indices = @transform_6, window_bounds = array<i64: 128, 1>}]} {
    %c0 = arith.constant 0 : index
    %c0_0 = arith.constant 0 : index
    %0 = vector.load %arg1[%c0, %c0_0] : memref<128x66xf32, #tpu.memory_space<vmem>>, vector<128x66xf32>
    %c0_1 = arith.constant 0 : index
    %c0_2 = arith.constant 0 : index
    %1 = vector.load %arg2[%c0_1, %c0_2] : memref<66x128xf32, #tpu.memory_space<vmem>>, vector<66x128xf32>
    %cst = arith.constant dense<0.000000e+00> : vector<128x128xf32>
    %2 = tpu.matmul %0, %1, %cst {dimension_numbers = #tpu.dot_dimension_numbers<[1], [0], [0], [1], [0, 0, 1, 1], [], []>} : vector<128x66xf32>, vector<66x128xf32>, vector<128x128xf32> -> vector<128x128xf32>
    %c0_3 = arith.constant 0 : index
    %c0_4 = arith.constant 0 : index
    %3 = vector.load %arg3[%c0_3, %c0_4] : memref<1x128xf32, #tpu.memory_space<vmem>>, vector<1x128xf32>
    %4 = vector.broadcast %3 : vector<1x128xf32> to vector<128x128xf32>
    %5 = arith.addf %2, %4 : vector<128x128xf32>
    %cst_5 = arith.constant dense<0.000000e+00> : vector<128xf32>
    %6 = vector.multi_reduction <add>, %5, %cst_5 [1] : vector<128x128xf32> to vector<128xf32>
    %7 = vector.shape_cast %6 : vector<128xf32> to vector<128x1xf32>
    %cst_6 = arith.constant 1.280000e+02 : f32
    %8 = vector.broadcast %cst_6 : f32 to vector<128x1xf32>
    %9 = arith.divf %7, %8 : vector<128x1xf32>
    %10 = vector.broadcast %9 : vector<128x1xf32> to vector<128x128xf32>
    %11 = arith.subf %5, %10 : vector<128x128xf32>
    %12 = arith.mulf %11, %11 : vector<128x128xf32>
    %cst_7 = arith.constant dense<0.000000e+00> : vector<128xf32>
    %13 = vector.multi_reduction <add>, %12, %cst_7 [1] : vector<128x128xf32> to vector<128xf32>
    %14 = vector.shape_cast %13 : vector<128xf32> to vector<128x1xf32>
    %cst_8 = arith.constant 1.280000e+02 : f32
    %15 = vector.broadcast %cst_8 : f32 to vector<128x1xf32>
    %16 = arith.divf %14, %15 : vector<128x1xf32>
    %cst_9 = arith.constant 9.99999974E-6 : f32
    %17 = vector.broadcast %cst_9 : f32 to vector<128x1xf32>
    %18 = arith.addf %16, %17 : vector<128x1xf32>
    %19 = math.rsqrt %18 : vector<128x1xf32>
    %20 = vector.broadcast %19 : vector<128x1xf32> to vector<128x128xf32>
    %21 = arith.mulf %11, %20 : vector<128x128xf32>
    %c0_10 = arith.constant 0 : index
    %c0_11 = arith.constant 0 : index
    %22 = vector.load %arg4[%c0_10, %c0_11] : memref<128x64xf32, #tpu.memory_space<vmem>>, vector<128x64xf32>
    %cst_12 = arith.constant dense<0.000000e+00> : vector<128x64xf32>
    %23 = tpu.matmul %21, %22, %cst_12 {dimension_numbers = #tpu.dot_dimension_numbers<[1], [0], [0], [1], [0, 0, 1, 1], [], []>} : vector<128x128xf32>, vector<128x64xf32>, vector<128x64xf32> -> vector<128x64xf32>
    %c0_13 = arith.constant 0 : index
    %c0_14 = arith.constant 0 : index
    %24 = vector.load %arg5[%c0_13, %c0_14] : memref<1x64xf32, #tpu.memory_space<vmem>>, vector<1x64xf32>
    %25 = vector.broadcast %24 : vector<1x64xf32> to vector<128x64xf32>
    %26 = arith.addf %23, %25 : vector<128x64xf32>
    %cst_15 = arith.constant 0.000000e+00 : f32
    %27 = vector.broadcast %cst_15 : f32 to vector<128x64xf32>
    %28 = arith.maximumf %26, %27 : vector<128x64xf32>
    %c0_16 = arith.constant 0 : index
    %c0_17 = arith.constant 0 : index
    %29 = vector.load %arg6[%c0_16, %c0_17] : memref<64x1xf32, #tpu.memory_space<vmem>>, vector<64x1xf32>
    %cst_18 = arith.constant dense<0.000000e+00> : vector<128x1xf32>
    %30 = tpu.matmul %28, %29, %cst_18 {dimension_numbers = #tpu.dot_dimension_numbers<[1], [0], [0], [1], [0, 0, 1, 1], [], []>} : vector<128x64xf32>, vector<64x1xf32>, vector<128x1xf32> -> vector<128x1xf32>
    %c0_19 = arith.constant 0 : index
    %c0_20 = arith.constant 0 : index
    %31 = vector.load %arg7[%c0_19, %c0_20] : memref<128x1xf32, #tpu.memory_space<vmem>>, vector<128x1xf32>
    tpu.vector_store %arg7[%c0_19, %c0_20], %30 {strides = array<i32>} : memref<128x1xf32, #tpu.memory_space<vmem>>, vector<128x1xf32>,
    return
  }
  func.func @transform_0(%arg0: i32) -> (i32, i32) {
    %c0_i32 = arith.constant 0 : i32
    %c0_i32_0 = arith.constant 0 : i32
    return %arg0, %c0_i32 : i32, i32
  }
  func.func @transform_1(%arg0: i32) -> (i32, i32) {
    %c0_i32 = arith.constant 0 : i32
    %c0_i32_0 = arith.constant 0 : i32
    %c0_i32_1 = arith.constant 0 : i32
    return %c0_i32, %c0_i32_0 : i32, i32
  }
  func.func @transform_2(%arg0: i32) -> (i32, i32) {
    %c0_i32 = arith.constant 0 : i32
    %c0_i32_0 = arith.constant 0 : i32
    %c0_i32_1 = arith.constant 0 : i32
    return %c0_i32, %c0_i32_0 : i32, i32
  }
  func.func @transform_3(%arg0: i32) -> (i32, i32) {
    %c0_i32 = arith.constant 0 : i32
    %c0_i32_0 = arith.constant 0 : i32
    %c0_i32_1 = arith.constant 0 : i32
    return %c0_i32, %c0_i32_0 : i32, i32
  }
  func.func @transform_4(%arg0: i32) -> (i32, i32) {
    %c0_i32 = arith.constant 0 : i32
    %c0_i32_0 = arith.constant 0 : i32
    %c0_i32_1 = arith.constant 0 : i32
    return %c0_i32, %c0_i32_0 : i32, i32
  }
  func.func @transform_5(%arg0: i32) -> (i32, i32) {
    %c0_i32 = arith.constant 0 : i32
    %c0_i32_0 = arith.constant 0 : i32
    %c0_i32_1 = arith.constant 0 : i32
    return %c0_i32, %c0_i32_0 : i32, i32
  }
  func.func @transform_6(%arg0: i32) -> (i32, i32) {
    %c0_i32 = arith.constant 0 : i32
    %c0_i32_0 = arith.constant 0 : i32
    return %arg0, %c0_i32 : i32, i32
  }
}

</mosaic_0001>

<llo_original>
// kernel: cross_dimensional_attention.1
$region0: #{cross_dimensional_attention.1}
  #allocation0 [shape = 'u32[]', space=smem, size = 0x4, offset = 0x4, fixed_abs, tag = 'smem constant byte address 0x4 - core index']
  #allocation1 [shape = 'u32[144,128]{1,0:T(1,128)}', space=vmem, size = 0x12000, scoped, tag = 'internal scratch']
  %s0 = inlined_call_operand.vmem [shape: f32[200,66], index: 0, kind: input, shape index: {}]
  %s1 = inlined_call_operand.vmem [shape: f32[66,128], index: 1, kind: input, shape index: {}]
  %s2 = inlined_call_operand.vmem [shape: f32[1,128], index: 2, kind: input, shape index: {}]
  %s3 = inlined_call_operand.vmem [shape: f32[128,64], index: 3, kind: input, shape index: {}]
  %s4 = inlined_call_operand.vmem [shape: f32[1,64], index: 4, kind: input, shape index: {}]
  %s5 = inlined_call_operand.vmem [shape: f32[64,1], index: 5, kind: input, shape index: {}]
  %s6 = inlined_call_operand.vmem [shape: f32[200,1], index: 6, kind: output, shape index: {}]
  %s7 = sld [smem:[#allocation0]]
  $region105: #{cross_dimensional_attention.1} parent=0
    _
  %s9 = ssub.s32 1, %s7
  %s10 = scalar_select 0, %s9, %s7
  $region1: #{cross_dimensional_attention.1} parent=0
    #allocation2 [shape = 'u8[131072]{0}', space=vmem, size = 0x20000, scoped, tag = 'output window, operand 0']
    loop: start=0, step=1, limit=4
    $region2: #{cross_dimensional_attention.1} parent=1 // loop_pre_header
      _
    $region3: #{cross_dimensional_attention.1} parent=1 // loop_header
      %s12 = sphi 0, %s16
      %p13 = scmp.ge.s32.totalorder %s12, 4
      %s22 = sphi 0, %s24
      %s25 = sphi 0, %s22
      %s26 = sphi 0, %s25
      %s42 = sphi 0, %s26
      %s46 = sphi 0, %s46
      %s48 = sphi 0, %s46
      %s49 = sphi 0, %s48
      %s63 = sphi 0, %s49
      %s67 = sphi 0, %s67
      %s69 = sphi 0, %s67
      %s70 = sphi 0, %s69
      %s84 = sphi 0, %s70
      %s88 = sphi 0, %s88
      %s90 = sphi 0, %s88
      %s91 = sphi 0, %s90
      %s105 = sphi 0, %s91
      %s109 = sphi 0, %s109
      %s111 = sphi 0, %s109
      %s112 = sphi 0, %s111
      %s126 = sphi 0, %s112
      %s130 = sphi 0, %s130
      %s132 = sphi 0, %s130
      %s133 = sphi 0, %s132
      %s147 = sphi 0, %s133
      %s153 = sphi 0, %s155
      %s156 = sphi 0, %s153
      %s157 = sphi 0, %s156
      %s173 = sphi 0, %s157
    $region4: #{cross_dimensional_attention.1} parent=1 // loop_header_branch
      %15 = sbr.rel (%p13) target = $region8
    $region5: #{cross_dimensional_attention.1} parent=1 // loop_body
      %s17 = ssub.s32 %s12, 1
      %s18 = ssub.s32 %s12, 2
      %s19 = sadd.s32 %s12, 1
      %s20 = ssub.s32 %s12, %s19
      %p21 = scmp.eq.s32.totalorder %s20, 0
      %s23 = sadd.s32 %s22, 1
      %s24 = scalar_select %p21, %s22, %s23
      %p27 = pneg %p21
      %p28 = scmp.eq.s32.totalorder %s12, 1
      %p29 = por %p27, %p28
      %p30 = scmp.ne.s32.totalorder %s22, %s25
      %p31 = scmp.eq.s32.totalorder %s12, 0
      %p32 = por %p30, %p31
      %p33 = scmp.ne.s32.totalorder %s22, %s25
      %p34 = scmp.eq.s32.totalorder %s17, 1
      %p35 = por %p33, %p34
      %p36 = scmp.ne.s32.totalorder %s25, %s26
      %p37 = scmp.eq.s32.totalorder %s17, 0
      %p38 = por %p36, %p37
      %p39 = scmp.ne.s32.totalorder %s25, %s26
      %p40 = scmp.eq.s32.totalorder %s18, 1
      %p41 = por %p39, %p40
      %p43 = scmp.ne.s32.totalorder %s26, %s42
      %p44 = scmp.eq.s32.totalorder %s18, 0
      %p45 = por %p43, %p44
      %s47 = sadd.s32 %s46, 1
      %p50 = scmp.eq.s32.totalorder %s12, 1
      %p51 = scmp.ne.s32.totalorder %s46, %s48
      %p52 = scmp.eq.s32.totalorder %s12, 0
      %p53 = por %p51, %p52
      %p54 = scmp.ne.s32.totalorder %s46, %s48
      %p55 = scmp.eq.s32.totalorder %s17, 1
      %p56 = por %p54, %p55
      %p57 = scmp.ne.s32.totalorder %s48, %s49
      %p58 = scmp.eq.s32.totalorder %s17, 0
      %p59 = por %p57, %p58
      %p60 = scmp.ne.s32.totalorder %s48, %s49
      %p61 = scmp.eq.s32.totalorder %s18, 1
      %p62 = por %p60, %p61
      %p64 = scmp.ne.s32.totalorder %s49, %s63
      %p65 = scmp.eq.s32.totalorder %s18, 0
      %p66 = por %p64, %p65
      %s68 = sadd.s32 %s67, 1
      %p71 = scmp.eq.s32.totalorder %s12, 1
      %p72 = scmp.ne.s32.totalorder %s67, %s69
      %p73 = scmp.eq.s32.totalorder %s12, 0
      %p74 = por %p72, %p73
      %p75 = scmp.ne.s32.totalorder %s67, %s69
      %p76 = scmp.eq.s32.totalorder %s17, 1
      %p77 = por %p75, %p76
      %p78 = scmp.ne.s32.totalorder %s69, %s70
      %p79 = scmp.eq.s32.totalorder %s17, 0
      %p80 = por %p78, %p79
      %p81 = scmp.ne.s32.totalorder %s69, %s70
      %p82 = scmp.eq.s32.totalorder %s18, 1
      %p83 = por %p81, %p82
      %p85 = scmp.ne.s32.totalorder %s70, %s84
      %p86 = scmp.eq.s32.totalorder %s18, 0
      %p87 = por %p85, %p86
      %s89 = sadd.s32 %s88, 1
      %p92 = scmp.eq.s32.totalorder %s12, 1
      %p93 = scmp.ne.s32.totalorder %s88, %s90
      %p94 = scmp.eq.s32.totalorder %s12, 0
      %p95 = por %p93, %p94
      %p96 = scmp.ne.s32.totalorder %s88, %s90
      %p97 = scmp.eq.s32.totalorder %s17, 1
      %p98 = por %p96, %p97
      %p99 = scmp.ne.s32.totalorder %s90, %s91
      %p100 = scmp.eq.s32.totalorder %s17, 0
      %p101 = por %p99, %p100
      %p102 = scmp.ne.s32.totalorder %s90, %s91
      %p103 = scmp.eq.s32.totalorder %s18, 1
      %p104 = por %p102, %p103
      %p106 = scmp.ne.s32.totalorder %s91, %s105
      %p107 = scmp.eq.s32.totalorder %s18, 0
      %p108 = por %p106, %p107
      %s110 = sadd.s32 %s109, 1
      %p113 = scmp.eq.s32.totalorder %s12, 1
      %p114 = scmp.ne.s32.totalorder %s109, %s111
      %p115 = scmp.eq.s32.totalorder %s12, 0
      %p116 = por %p114, %p115
      %p117 = scmp.ne.s32.totalorder %s109, %s111
      %p118 = scmp.eq.s32.totalorder %s17, 1
      %p119 = por %p117, %p118
      %p120 = scmp.ne.s32.totalorder %s111, %s112
      %p121 = scmp.eq.s32.totalorder %s17, 0
      %p122 = por %p120, %p121
      %p123 = scmp.ne.s32.totalorder %s111, %s112
      %p124 = scmp.eq.s32.totalorder %s18, 1
      %p125 = por %p123, %p124
      %p127 = scmp.ne.s32.totalorder %s112, %s126
      %p128 = scmp.eq.s32.totalorder %s18, 0
      %p129 = por %p127, %p128
      %s131 = sadd.s32 %s130, 1
      %p134 = scmp.eq.s32.totalorder %s12, 1
      %p135 = scmp.ne.s32.totalorder %s130, %s132
      %p136 = scmp.eq.s32.totalorder %s12, 0
      %p137 = por %p135, %p136
      %p138 = scmp.ne.s32.totalorder %s130, %s132
      %p139 = scmp.eq.s32.totalorder %s17, 1
      %p140 = por %p138, %p139
      %p141 = scmp.ne.s32.totalorder %s132, %s133
      %p142 = scmp.eq.s32.totalorder %s17, 0
      %p143 = por %p141, %p142
      %p144 = scmp.ne.s32.totalorder %s132, %s133
      %p145 = scmp.eq.s32.totalorder %s18, 1
      %p146 = por %p144, %p145
      %p148 = scmp.ne.s32.totalorder %s133, %s147
      %p149 = scmp.eq.s32.totalorder %s18, 0
      %p150 = por %p148, %p149
      %s151 = ssub.s32 %s12, %s19
      %p152 = scmp.eq.s32.totalorder %s151, 0
      %s154 = sadd.s32 %s153, 1
      %s155 = scalar_select %p152, %s153, %s154
      %p158 = pneg %p152
      %p159 = scmp.eq.s32.totalorder %s12, 1
      %p160 = por %p158, %p159
      %p161 = scmp.ne.s32.totalorder %s153, %s156
      %p162 = scmp.eq.s32.totalorder %s12, 0
      %p163 = por %p161, %p162
      %p164 = scmp.ne.s32.totalorder %s153, %s156
      %p165 = scmp.eq.s32.totalorder %s17, 1
      %p166 = por %p164, %p165
      %p167 = scmp.ne.s32.totalorder %s156, %s157
      %p168 = scmp.eq.s32.totalorder %s17, 0
      %p169 = por %p167, %p168
      %p170 = scmp.ne.s32.totalorder %s156, %s157
      %p171 = scmp.eq.s32.totalorder %s18, 1
      %p172 = por %p170, %p171
      %p174 = scmp.ne.s32.totalorder %s157, %s173
      %p175 = scmp.eq.s32.totalorder %s18, 0
      %p176 = por %p174, %p175
      %p177 = scmp.le.s32.totalorder 1, %s12
      %p178 = scmp.lt.s32.totalorder %s12, 3
      %p179 = pnand %p177, %p178
      %p180 = pneg %p179
      // Predicated region
      $region9: #{cross_dimensional_attention.1} parent=5 // pred_check
        _
      $region10: #{cross_dimensional_attention.1} parent=5 // pred_check_branch
        %182 = sbr.rel (%p179) target = $region12
      $region11: #{cross_dimensional_attention.1} parent=5 // pred_region
        %s183 = ssub.s32 %s12, 1
        // Predicated region
        $region13: #{cross_dimensional_attention.1} parent=11 // pred_check
          %p184 = pneg %p59
        $region14: #{cross_dimensional_attention.1} parent=11 // pred_check_branch
          %186 = sbr.rel (%p184) target = $region16
        $region15: #{cross_dimensional_attention.1} parent=11 // pred_region
          _
        $region16: #{cross_dimensional_attention.1} parent=11 // pred_fallthru
          _
        // Predicated region
        $region17: #{cross_dimensional_attention.1} parent=11 // pred_check
          %p187 = pneg %p80
        $region18: #{cross_dimensional_attention.1} parent=11 // pred_check_branch
          %189 = sbr.rel (%p187) target = $region20
        $region19: #{cross_dimensional_attention.1} parent=11 // pred_region
          _
        $region20: #{cross_dimensional_attention.1} parent=11 // pred_fallthru
          _
        // Predicated region
        $region21: #{cross_dimensional_attention.1} parent=11 // pred_check
          %p190 = pneg %p101
        $region22: #{cross_dimensional_attention.1} parent=11 // pred_check_branch
          %192 = sbr.rel (%p190) target = $region24
        $region23: #{cross_dimensional_attention.1} parent=11 // pred_region
          _
        $region24: #{cross_dimensional_attention.1} parent=11 // pred_fallthru
          _
        // Predicated region
        $region25: #{cross_dimensional_attention.1} parent=11 // pred_check
          %p193 = pneg %p122
        $region26: #{cross_dimensional_attention.1} parent=11 // pred_check_branch
          %195 = sbr.rel (%p193) target = $region28
        $region27: #{cross_dimensional_attention.1} parent=11 // pred_region
          _
        $region28: #{cross_dimensional_attention.1} parent=11 // pred_fallthru
          _
        // Predicated region
        $region29: #{cross_dimensional_attention.1} parent=11 // pred_check
          %p196 = pneg %p143
        $region30: #{cross_dimensional_attention.1} parent=11 // pred_check_branch
          %198 = sbr.rel (%p196) target = $region32
        $region31: #{cross_dimensional_attention.1} parent=11 // pred_region
          _
        $region32: #{cross_dimensional_attention.1} parent=11 // pred_fallthru
          _
      $region12: #{cross_dimensional_attention.1} parent=5 // pred_fallthru
        _
      %p199 = scmp.lt.s32.totalorder %s12, 2
      // Predicated region
      $region33: #{cross_dimensional_attention.1} parent=5 // pred_check
        %p200 = pneg %p199
      $region34: #{cross_dimensional_attention.1} parent=5 // pred_check_branch
        %202 = sbr.rel (%p200) target = $region36
      $region35: #{cross_dimensional_attention.1} parent=5 // pred_region
        // Predicated region
        $region37: #{cross_dimensional_attention.1} parent=35 // pred_check
          %p203 = pneg %p32
        $region38: #{cross_dimensional_attention.1} parent=35 // pred_check_branch
          %205 = sbr.rel (%p203) target = $region40
        $region39: #{cross_dimensional_attention.1} parent=35 // pred_region
          %s206 = smul.u32 16, %s12
          %s207 = ssub.s32 25, %s206
          %p208 = scmp.lt.s32.totalorder %s207, 16
          %s209 = scalar_select %p208, %s207, 16
          %s210 = smul.u32 128, %s209
          %p211 = scmp.lt.s32.totalorder %s206, 24
          %s212 = scalar_select %p211, %s206, 24
          %s213 = smul.addr %s212, 8
          %s214 = scalar_lea.vmem %s0, %s213
          %s215 = smul.u32 16, %s12
          %s216 = ssub.s32 25, %s215
          %p217 = scmp.lt.s32.totalorder %s216, 16
          %s218 = scalar_select %p217, %s216, 16
          %s219 = smul.u32 128, %s218
        $region40: #{cross_dimensional_attention.1} parent=35 // pred_fallthru
          _
      $region36: #{cross_dimensional_attention.1} parent=5 // pred_fallthru
        _
      %p220 = scmp.le.s32.totalorder 1, %s12
      %p221 = scmp.lt.s32.totalorder %s12, 3
      %p222 = pnand %p220, %p221
      %p223 = pneg %p222
      // Predicated region
      $region41: #{cross_dimensional_attention.1} parent=5 // pred_check
        _
      $region42: #{cross_dimensional_attention.1} parent=5 // pred_check_branch
        %225 = sbr.rel (%p222) target = $region44
      $region43: #{cross_dimensional_attention.1} parent=5 // pred_region
        %s226 = ssub.s32 %s12, 1
        %s227 = smul.u32 16, %s17
        %s228 = ssub.s32 25, %s227
        %p229 = scmp.lt.s32.totalorder %s228, 16
        %s230 = scalar_select %p229, %s228, 16
        %s231 = smul.u32 128, %s230
        %p232 = scmp.lt.s32.totalorder %s227, 24
        %s233 = scalar_select %p232, %s227, 24
        %s234 = smul.addr %s233, 8
        %s235 = scalar_lea.vmem %s0, %s234
        %p236 = pneg %p38
        %p237 = pneg %p35
        %p238 = pneg %p59
        %p239 = pneg %p56
        %p240 = pneg %p80
        %p241 = pneg %p77
        %p242 = pneg %p101
        %p243 = pneg %p98
        %p244 = pneg %p122
        %p245 = pneg %p119
        %p246 = pneg %p143
        %p247 = pneg %p140
        %p248 = pneg %p169
        %p249 = pneg %p166
        %s250 = sand.u32 %s156, 1
        %s251 = sand.u32 %s156, 1
        %s252 = smul.addr %s251, 128
        %s253 = scalar_lea.vmem [#allocation2], %s252
        %s254 = smul.u32 16, %s17
        %s255 = ssub.s32 25, %s254
        %p256 = scmp.lt.s32.totalorder %s255, 16
        %s257 = scalar_select %p256, %s255, 16
        %s258 = smul.u32 128, %s257
        %p259 = scmp.lt.s32.totalorder %s254, 24
        %s260 = scalar_select %p259, %s254, 24
        %s261 = smul.addr %s260, 8
        %s262 = scalar_lea.vmem %s0, %s261
        %s263 = smul.u32 16, %s17
        %s264 = ssub.s32 25, %s263
        %p265 = scmp.lt.s32.totalorder %s264, 16
        %s266 = scalar_select %p265, %s264, 16
        %s267 = smul.u32 128, %s266
        %s268 = smul.u32 16, %s17
        %s269 = ssub.s32 25, %s268
        %p270 = scmp.lt.s32.totalorder %s269, 16
        %s271 = scalar_select %p270, %s269, 16
        %s272 = smul.u32 128, %s271
        %v273 = vld [vmem:[%s262] sm:$0xff]
        %v274 = vld [vmem:[%s262 + $0x8] sm:$0xff]
        %v275 = vld [vmem:[%s262 + $0x10] sm:$0xff]
        %v276 = vld [vmem:[%s262 + $0x18] sm:$0xff]
        %v277 = vld [vmem:[%s262 + $0x20] sm:$0xff]
        %v278 = vld [vmem:[%s262 + $0x28] sm:$0xff]
        %v279 = vld [vmem:[%s262 + $0x30] sm:$0xff]
        %v280 = vld [vmem:[%s262 + $0x38] sm:$0xff]
        %v281 = vld [vmem:[%s262 + $0x40] sm:$0xff]
        %v282 = vld [vmem:[%s262 + $0x48] sm:$0xff]
        %v283 = vld [vmem:[%s262 + $0x50] sm:$0xff]
        %v284 = vld [vmem:[%s262 + $0x58] sm:$0xff]
        %v285 = vld [vmem:[%s262 + $0x60] sm:$0xff]
        %v286 = vld [vmem:[%s262 + $0x68] sm:$0xff]
        %v287 = vld [vmem:[%s262 + $0x70] sm:$0xff]
        %v288 = vld [vmem:[%s262 + $0x78] sm:$0xff]
        %v289 = vld [vmem:[%s1] sm:$0xff]
        %v290 = vld [vmem:[%s1 + $0x8] sm:$0xff]
        %v291 = vld [vmem:[%s1 + $0x10] sm:$0xff]
        %v292 = vld [vmem:[%s1 + $0x18] sm:$0xff]
        %v293 = vld [vmem:[%s1 + $0x20] sm:$0xff]
        %v294 = vld [vmem:[%s1 + $0x28] sm:$0xff]
        %v295 = vld [vmem:[%s1 + $0x30] sm:$0xff]
        %v296 = vld [vmem:[%s1 + $0x38] sm:$0xff]
        %v297 = vld [vmem:[%s1 + $0x40] sm:$0x3]
        %v298 = vld [vmem:[%s2] sm:$0x1]
        %v300 = vlaneseq
        %v301 = vshrl.u32 %v300, 7
        %v302 = vsub.s32 0, %v301
        %v303 = vrot.slane %v298, %v302
        %vm305 = vcmask 539648
        %v307 = vsel %vm305, %v273, 0
        %v310 = vsel %vm305, %v274, 0
        %v313 = vsel %vm305, %v275, 0
        %v316 = vsel %vm305, %v276, 0
        %v319 = vsel %vm305, %v277, 0
        %v322 = vsel %vm305, %v278, 0
        %v325 = vsel %vm305, %v279, 0
        %v328 = vsel %vm305, %v280, 0
        %v331 = vsel %vm305, %v281, 0
        %v334 = vsel %vm305, %v282, 0
        %v337 = vsel %vm305, %v283, 0
        %v340 = vsel %vm305, %v284, 0
        %v343 = vsel %vm305, %v285, 0
        %v346 = vsel %vm305, %v286, 0
        %v349 = vsel %vm305, %v287, 0
        %v352 = vsel %vm305, %v288, 0
        %vm354 = vcmask 1041408
        %v356 = vsel %vm354, %v297, 0
        %358 = vmatprep.subr.mxu0 0.0
        %359 = vmatpush1.msra.mxu0 %v289
        %360 = vmatprep.subr.mxu0 0.0
        %361 = vmatpush1.msra.mxu0 %v290
        %362 = vmatprep.subr.mxu0 0.0
        %363 = vmatpush1.msra.mxu0 %v291
        %364 = vmatprep.subr.mxu0 0.0
        %365 = vmatpush1.msra.mxu0 %v292
        %366 = vmatprep.subr.mxu0 0.0
        %367 = vmatpush1.msra.mxu0 %v293
        %368 = vmatprep.subr.mxu0 0.0
        %369 = vmatpush1.msra.mxu0 %v294
        %370 = vmatprep.subr.mxu0 0.0
        %371 = vmatpush1.msra.mxu0 %v295
        %372 = vmatprep.subr.mxu0 0.0
        %373 = vmatpush1.msra.mxu0 %v296
        %374 = vmatprep.subr.mxu0 0.0
        %375 = vmatpush1.msra.mxu0 %v356
        %376 = vmatprep.subr.mxu0 0.0
        %377 = vmatpush1.msra.mxu0 0.0
        %378 = vmatprep.subr.mxu0 0.0
        %379 = vmatpush1.msra.mxu0 0.0
        %380 = vmatprep.subr.mxu0 0.0
        %381 = vmatpush1.msra.mxu0 0.0
        %382 = vmatprep.subr.mxu0 0.0
        %383 = vmatpush1.msra.mxu0 0.0
        %384 = vmatprep.subr.mxu0 0.0
        %385 = vmatpush1.msra.mxu0 0.0
        %386 = vmatprep.subr.mxu0 0.0
        %387 = vmatpush1.msra.mxu0 0.0
        %388 = vmatprep.subr.mxu0 0.0
        %389 = vmatpush1.msra.mxu0 0.0
        %390 = vmatprep.subr.mxu0 0.0
        %391 = vmatpush1.msra.mxu0 0.0
        %392 = vmatprep.subr.mxu0 0.0
        %393 = vmatpush1.msra.mxu0 0.0
        %394 = vmatprep.subr.mxu0 0.0
        %395 = vmatpush1.msra.mxu0 0.0
        %396 = vmatprep.subr.mxu0 0.0
        %397 = vmatpush1.msra.mxu0 0.0
        %398 = vmatprep.subr.mxu0 0.0
        %399 = vmatpush1.msra.mxu0 0.0
        %400 = vmatprep.subr.mxu0 0.0
        %401 = vmatpush1.msra.mxu0 0.0
        %402 = vmatprep.subr.mxu0 0.0
        %403 = vmatpush1.msra.mxu0 0.0
        %404 = vmatprep.subr.mxu0 0.0
        %405 = vmatpush1.msra.mxu0 0.0
        %406 = vmatprep.subr.mxu0 0.0
        %407 = vmatpush1.msra.mxu0 0.0
        %408 = vmatprep.subr.mxu0 0.0
        %409 = vmatpush1.msra.mxu0 0.0
        %410 = vmatprep.subr.mxu0 0.0
        %411 = vmatpush1.msra.mxu0 0.0
        %412 = vmatprep.subr.mxu0 0.0
        %413 = vmatpush1.msra.mxu0 0.0
        %414 = vmatprep.subr.mxu0 0.0
        %415 = vmatpush1.msra.mxu0 0.0
        %416 = vmatprep.subr.mxu0 0.0
        %417 = vmatpush1.msra.mxu0 0.0
        %418 = vmatprep.subr.mxu0 0.0
        %419 = vmatpush1.msra.mxu0 0.0
        %420 = vmatprep.subr.mxu0 0.0
        %421 = vmatpush1.msra.mxu0 0.0
        %422 = vmatprep.mubr.f32.mxu0 0.0
        %423 = vmatmul.mubr.f32.gmra.mrb[0].mxu0 %v307
        %v424 = vpop.f32.mrb[0].mxu0
        %v425 = vadd.f32 %v303, %v424
        %v426 = vpop.f32.mrb[0].mxu0
        %427 = vmatprep.mubr.f32.mxu0 0.0
        %428 = vmatmul.mubr.f32.gmra.mrb[0].mxu0 %v310
        %v429 = vpop.f32.mrb[0].mxu0
        %v430 = vadd.f32 %v303, %v429
        %v431 = vpop.f32.mrb[0].mxu0
        %432 = vmatprep.mubr.f32.mxu0 0.0
        %433 = vmatmul.mubr.f32.gmra.mrb[0].mxu0 %v313
        %v434 = vpop.f32.mrb[0].mxu0
        %v435 = vadd.f32 %v303, %v434
        %v436 = vpop.f32.mrb[0].mxu0
        %437 = vmatprep.mubr.f32.mxu0 0.0
        %438 = vmatmul.mubr.f32.gmra.mrb[0].mxu0 %v316
        %v439 = vpop.f32.mrb[0].mxu0
        %v440 = vadd.f32 %v303, %v439
        %v441 = vpop.f32.mrb[0].mxu0
        %442 = vmatprep.mubr.f32.mxu0 0.0
        %443 = vmatmul.mubr.f32.gmra.mrb[0].mxu0 %v319
        %v444 = vpop.f32.mrb[0].mxu0
        %v445 = vadd.f32 %v303, %v444
        %v446 = vpop.f32.mrb[0].mxu0
        %447 = vmatprep.mubr.f32.mxu0 0.0
        %448 = vmatmul.mubr.f32.gmra.mrb[0].mxu0 %v322
        %v449 = vpop.f32.mrb[0].mxu0
        %v450 = vadd.f32 %v303, %v449
        %v451 = vpop.f32.mrb[0].mxu0
        %452 = vmatprep.mubr.f32.mxu0 0.0
        %453 = vmatmul.mubr.f32.gmra.mrb[0].mxu0 %v325
        %v454 = vpop.f32.mrb[0].mxu0
        %v455 = vadd.f32 %v303, %v454
        %v456 = vpop.f32.mrb[0].mxu0
        %457 = vmatprep.mubr.f32.mxu0 0.0
        %458 = vmatmul.mubr.f32.gmra.mrb[0].mxu0 %v328
        %v459 = vpop.f32.mrb[0].mxu0
        %v460 = vadd.f32 %v303, %v459
        %v461 = vpop.f32.mrb[0].mxu0
        %462 = vmatprep.mubr.f32.mxu0 0.0
        %463 = vmatmul.mubr.f32.gmra.mrb[0].mxu0 %v331
        %v464 = vpop.f32.mrb[0].mxu0
        %v465 = vadd.f32 %v303, %v464
        %v466 = vpop.f32.mrb[0].mxu0
        %467 = vmatprep.mubr.f32.mxu0 0.0
        %468 = vmatmul.mubr.f32.gmra.mrb[0].mxu0 %v334
        %v469 = vpop.f32.mrb[0].mxu0
        %v470 = vadd.f32 %v303, %v469
        %v471 = vpop.f32.mrb[0].mxu0
        %472 = vmatprep.mubr.f32.mxu0 0.0
        %473 = vmatmul.mubr.f32.gmra.mrb[0].mxu0 %v337
        %v474 = vpop.f32.mrb[0].mxu0
        %v475 = vadd.f32 %v303, %v474
        %v476 = vpop.f32.mrb[0].mxu0
        %477 = vmatprep.mubr.f32.mxu0 0.0
        %478 = vmatmul.mubr.f32.gmra.mrb[0].mxu0 %v340
        %v479 = vpop.f32.mrb[0].mxu0
        %v480 = vadd.f32 %v303, %v479
        %v481 = vpop.f32.mrb[0].mxu0
        %482 = vmatprep.mubr.f32.mxu0 0.0
        %483 = vmatmul.mubr.f32.gmra.mrb[0].mxu0 %v343
        %v484 = vpop.f32.mrb[0].mxu0
        %v485 = vadd.f32 %v303, %v484
        %v486 = vpop.f32.mrb[0].mxu0
        %487 = vmatprep.mubr.f32.mxu0 0.0
        %488 = vmatmul.mubr.f32.gmra.mrb[0].mxu0 %v346
        %v489 = vpop.f32.mrb[0].mxu0
        %v490 = vadd.f32 %v303, %v489
        %v491 = vpop.f32.mrb[0].mxu0
        %492 = vmatprep.mubr.f32.mxu0 0.0
        %493 = vmatmul.mubr.f32.gmra.mrb[0].mxu0 %v349
        %v494 = vpop.f32.mrb[0].mxu0
        %v495 = vadd.f32 %v303, %v494
        %v496 = vpop.f32.mrb[0].mxu0
        %497 = vmatprep.mubr.f32.mxu0 0.0
        %498 = vmatmul.mubr.f32.gmra.mrb[0].mxu0 %v352
        %v499 = vpop.f32.mrb[0].mxu0
        %v500 = vadd.f32 %v303, %v499
        %v501 = vpop.f32.mrb[0].mxu0
        %502 = vdwg.mxu0
        %503 = vadd.xlane.f32.xlu0 %v425
        %v504 = vpop.xlane.xlu0 %503
        %505 = vadd.xlane.f32.xlu0 %v430
        %v506 = vpop.xlane.xlu0 %505
        %507 = vadd.xlane.f32.xlu0 %v435
        %v508 = vpop.xlane.xlu0 %507
        %509 = vadd.xlane.f32.xlu0 %v440
        %v510 = vpop.xlane.xlu0 %509
        %511 = vadd.xlane.f32.xlu0 %v445
        %v512 = vpop.xlane.xlu0 %511
        %513 = vadd.xlane.f32.xlu0 %v450
        %v514 = vpop.xlane.xlu0 %513
        %515 = vadd.xlane.f32.xlu0 %v455
        %v516 = vpop.xlane.xlu0 %515
        %517 = vadd.xlane.f32.xlu0 %v460
        %v518 = vpop.xlane.xlu0 %517
        %519 = vadd.xlane.f32.xlu0 %v465
        %v520 = vpop.xlane.xlu0 %519
        %521 = vadd.xlane.f32.xlu0 %v470
        %v522 = vpop.xlane.xlu0 %521
        %523 = vadd.xlane.f32.xlu0 %v475
        %v524 = vpop.xlane.xlu0 %523
        %525 = vadd.xlane.f32.xlu0 %v480
        %v526 = vpop.xlane.xlu0 %525
        %527 = vadd.xlane.f32.xlu0 %v485
        %v528 = vpop.xlane.xlu0 %527
        %529 = vadd.xlane.f32.xlu0 %v490
        %v530 = vpop.xlane.xlu0 %529
        %531 = vadd.xlane.f32.xlu0 %v495
        %v532 = vpop.xlane.xlu0 %531
        %533 = vadd.xlane.f32.xlu0 %v500
        %v534 = vpop.xlane.xlu0 %533
        %v535 = vrcp.pop 128.0
        %v536 = vmul.f32 %v504, %v535
        %v537 = vmul.f32 %v506, %v535
        %v538 = vmul.f32 %v508, %v535
        %v539 = vmul.f32 %v510, %v535
        %v540 = vmul.f32 %v512, %v535
        %v541 = vmul.f32 %v514, %v535
        %v542 = vmul.f32 %v516, %v535
        %v543 = vmul.f32 %v518, %v535
        %v544 = vmul.f32 %v520, %v535
        %v545 = vmul.f32 %v522, %v535
        %v546 = vmul.f32 %v524, %v535
        %v547 = vmul.f32 %v526, %v535
        %v548 = vmul.f32 %v528, %v535
        %v549 = vmul.f32 %v530, %v535
        %v550 = vmul.f32 %v532, %v535
        %v551 = vmul.f32 %v534, %v535
        %v552 = vsub.f32 %v425, %v536
        %v553 = vsub.f32 %v430, %v537
        %v554 = vsub.f32 %v435, %v538
        %v555 = vsub.f32 %v440, %v539
        %v556 = vsub.f32 %v445, %v540
        %v557 = vsub.f32 %v450, %v541
        %v558 = vsub.f32 %v455, %v542
        %v559 = vsub.f32 %v460, %v543
        %v560 = vsub.f32 %v465, %v544
        %v561 = vsub.f32 %v470, %v545
        %v562 = vsub.f32 %v475, %v546
        %v563 = vsub.f32 %v480, %v547
        %v564 = vsub.f32 %v485, %v548
        %v565 = vsub.f32 %v490, %v549
        %v566 = vsub.f32 %v495, %v550
        %v567 = vsub.f32 %v500, %v551
        %v568 = vmul.f32 %v552, %v552
        %v569 = vmul.f32 %v553, %v553
        %v570 = vmul.f32 %v554, %v554
        %v571 = vmul.f32 %v555, %v555
        %v572 = vmul.f32 %v556, %v556
        %v573 = vmul.f32 %v557, %v557
        %v574 = vmul.f32 %v558, %v558
        %v575 = vmul.f32 %v559, %v559
        %v576 = vmul.f32 %v560, %v560
        %v577 = vmul.f32 %v561, %v561
        %v578 = vmul.f32 %v562, %v562
        %v579 = vmul.f32 %v563, %v563
        %v580 = vmul.f32 %v564, %v564
        %v581 = vmul.f32 %v565, %v565
        %v582 = vmul.f32 %v566, %v566
        %v583 = vmul.f32 %v567, %v567
        %584 = vadd.xlane.f32.xlu0 %v568
        %v585 = vpop.xlane.xlu0 %584
        %586 = vadd.xlane.f32.xlu0 %v569
        %v587 = vpop.xlane.xlu0 %586
        %588 = vadd.xlane.f32.xlu0 %v570
        %v589 = vpop.xlane.xlu0 %588
        %590 = vadd.xlane.f32.xlu0 %v571
        %v591 = vpop.xlane.xlu0 %590
        %592 = vadd.xlane.f32.xlu0 %v572
        %v593 = vpop.xlane.xlu0 %592
        %594 = vadd.xlane.f32.xlu0 %v573
        %v595 = vpop.xlane.xlu0 %594
        %596 = vadd.xlane.f32.xlu0 %v574
        %v597 = vpop.xlane.xlu0 %596
        %598 = vadd.xlane.f32.xlu0 %v575
        %v599 = vpop.xlane.xlu0 %598
        %600 = vadd.xlane.f32.xlu0 %v576
        %v601 = vpop.xlane.xlu0 %600
        %602 = vadd.xlane.f32.xlu0 %v577
        %v603 = vpop.xlane.xlu0 %602
        %604 = vadd.xlane.f32.xlu0 %v578
        %v605 = vpop.xlane.xlu0 %604
        %606 = vadd.xlane.f32.xlu0 %v579
        %v607 = vpop.xlane.xlu0 %606
        %608 = vadd.xlane.f32.xlu0 %v580
        %v609 = vpop.xlane.xlu0 %608
        %610 = vadd.xlane.f32.xlu0 %v581
        %v611 = vpop.xlane.xlu0 %610
        %612 = vadd.xlane.f32.xlu0 %v582
        %v613 = vpop.xlane.xlu0 %612
        %614 = vadd.xlane.f32.xlu0 %v583
        %v615 = vpop.xlane.xlu0 %614
        %v616 = vmul.f32 %v585, %v535
        %v617 = vmul.f32 %v587, %v535
        %v618 = vmul.f32 %v589, %v535
        %v619 = vmul.f32 %v591, %v535
        %v620 = vmul.f32 %v593, %v535
        %v621 = vmul.f32 %v595, %v535
        %v622 = vmul.f32 %v597, %v535
        %v623 = vmul.f32 %v599, %v535
        %v624 = vmul.f32 %v601, %v535
        %v625 = vmul.f32 %v603, %v535
        %v626 = vmul.f32 %v605, %v535
        %v627 = vmul.f32 %v607, %v535
        %v628 = vmul.f32 %v609, %v535
        %v629 = vmul.f32 %v611, %v535
        %v630 = vmul.f32 %v613, %v535
        %v631 = vmul.f32 %v615, %v535
        %v632 = vadd.f32 %v616, 1e-05
        %v633 = vadd.f32 %v617, 1e-05
        %v634 = vadd.f32 %v618, 1e-05
        %v635 = vadd.f32 %v619, 1e-05
        %v636 = vadd.f32 %v620, 1e-05
        %v637 = vadd.f32 %v621, 1e-05
        %v638 = vadd.f32 %v622, 1e-05
        %v639 = vadd.f32 %v623, 1e-05
        %v640 = vadd.f32 %v624, 1e-05
        %v641 = vadd.f32 %v625, 1e-05
        %v642 = vadd.f32 %v626, 1e-05
        %v643 = vadd.f32 %v627, 1e-05
        %v644 = vadd.f32 %v628, 1e-05
        %v645 = vadd.f32 %v629, 1e-05
        %v646 = vadd.f32 %v630, 1e-05
        %v647 = vadd.f32 %v631, 1e-05
        %v648 = vrsqrt.pop %v632
        %v649 = vrsqrt.pop %v633
        %v650 = vrsqrt.pop %v634
        %v651 = vrsqrt.pop %v635
        %v652 = vrsqrt.pop %v636
        %v653 = vrsqrt.pop %v637
        %v654 = vrsqrt.pop %v638
        %v655 = vrsqrt.pop %v639
        %v656 = vrsqrt.pop %v640
        %v657 = vrsqrt.pop %v641
        %v658 = vrsqrt.pop %v642
        %v659 = vrsqrt.pop %v643
        %v660 = vrsqrt.pop %v644
        %v661 = vrsqrt.pop %v645
        %v662 = vrsqrt.pop %v646
        %v663 = vrsqrt.pop %v647
        %v664 = vmul.f32 %v552, %v648
        %v665 = vmul.f32 %v553, %v649
        %v666 = vmul.f32 %v554, %v650
        %v667 = vmul.f32 %v555, %v651
        %v668 = vmul.f32 %v556, %v652
        %v669 = vmul.f32 %v557, %v653
        %v670 = vmul.f32 %v558, %v654
        %v671 = vmul.f32 %v559, %v655
        %v672 = vmul.f32 %v560, %v656
        %v673 = vmul.f32 %v561, %v657
        %v674 = vmul.f32 %v562, %v658
        %v675 = vmul.f32 %v563, %v659
        %v676 = vmul.f32 %v564, %v660
        %v677 = vmul.f32 %v565, %v661
        %v678 = vmul.f32 %v566, %v662
        %v679 = vmul.f32 %v567, %v663
        %v680 = vld [vmem:[%s3] sm:$0xff]
        %v681 = vld [vmem:[%s3 + $0x8] sm:$0xff]
        %v682 = vld [vmem:[%s3 + $0x10] sm:$0xff]
        %v683 = vld [vmem:[%s3 + $0x18] sm:$0xff]
        %v684 = vld [vmem:[%s3 + $0x20] sm:$0xff]
        %v685 = vld [vmem:[%s3 + $0x28] sm:$0xff]
        %v686 = vld [vmem:[%s3 + $0x30] sm:$0xff]
        %v687 = vld [vmem:[%s3 + $0x38] sm:$0xff]
        %v688 = vld [vmem:[%s3 + $0x40] sm:$0xff]
        %v689 = vld [vmem:[%s3 + $0x48] sm:$0xff]
        %v690 = vld [vmem:[%s3 + $0x50] sm:$0xff]
        %v691 = vld [vmem:[%s3 + $0x58] sm:$0xff]
        %v692 = vld [vmem:[%s3 + $0x60] sm:$0xff]
        %v693 = vld [vmem:[%s3 + $0x68] sm:$0xff]
        %v694 = vld [vmem:[%s3 + $0x70] sm:$0xff]
        %v695 = vld [vmem:[%s3 + $0x78] sm:$0xff]
        %v696 = vld [vmem:[%s4] sm:$0x1]
        %v698 = vlaneseq
        %v699 = vshrl.u32 %v698, 7
        %v700 = vsub.s32 0, %v699
        %v701 = vrot.slane %v696, %v700
        %703 = vmatprep.subr.mxu0 0.0
        %704 = vmatpush1.msra.mxu0 %v680
        %705 = vmatprep.subr.mxu0 0.0
        %706 = vmatpush1.msra.mxu0 %v681
        %707 = vmatprep.subr.mxu0 0.0
        %708 = vmatpush1.msra.mxu0 %v682
        %709 = vmatprep.subr.mxu0 0.0
        %710 = vmatpush1.msra.mxu0 %v683
        %711 = vmatprep.subr.mxu0 0.0
        %712 = vmatpush1.msra.mxu0 %v684
        %713 = vmatprep.subr.mxu0 0.0
        %714 = vmatpush1.msra.mxu0 %v685
        %715 = vmatprep.subr.mxu0 0.0
        %716 = vmatpush1.msra.mxu0 %v686
        %717 = vmatprep.subr.mxu0 0.0
        %718 = vmatpush1.msra.mxu0 %v687
        %719 = vmatprep.subr.mxu0 0.0
        %720 = vmatpush1.msra.mxu0 %v688
        %721 = vmatprep.subr.mxu0 0.0
        %722 = vmatpush1.msra.mxu0 %v689
        %723 = vmatprep.subr.mxu0 0.0
        %724 = vmatpush1.msra.mxu0 %v690
        %725 = vmatprep.subr.mxu0 0.0
        %726 = vmatpush1.msra.mxu0 %v691
        %727 = vmatprep.subr.mxu0 0.0
        %728 = vmatpush1.msra.mxu0 %v692
        %729 = vmatprep.subr.mxu0 0.0
        %730 = vmatpush1.msra.mxu0 %v693
        %731 = vmatprep.subr.mxu0 0.0
        %732 = vmatpush1.msra.mxu0 %v694
        %733 = vmatprep.subr.mxu0 0.0
        %734 = vmatpush1.msra.mxu0 %v695
        %735 = vmatprep.subr.mxu0 0.0
        %736 = vmatpush1.msra.mxu0 0.0
        %737 = vmatprep.subr.mxu0 0.0
        %738 = vmatpush1.msra.mxu0 0.0
        %739 = vmatprep.subr.mxu0 0.0
        %740 = vmatpush1.msra.mxu0 0.0
        %741 = vmatprep.subr.mxu0 0.0
        %742 = vmatpush1.msra.mxu0 0.0
        %743 = vmatprep.subr.mxu0 0.0
        %744 = vmatpush1.msra.mxu0 0.0
        %745 = vmatprep.subr.mxu0 0.0
        %746 = vmatpush1.msra.mxu0 0.0
        %747 = vmatprep.subr.mxu0 0.0
        %748 = vmatpush1.msra.mxu0 0.0
        %749 = vmatprep.subr.mxu0 0.0
        %750 = vmatpush1.msra.mxu0 0.0
        %751 = vmatprep.subr.mxu0 0.0
        %752 = vmatpush1.msra.mxu0 0.0
        %753 = vmatprep.subr.mxu0 0.0
        %754 = vmatpush1.msra.mxu0 0.0
        %755 = vmatprep.subr.mxu0 0.0
        %756 = vmatpush1.msra.mxu0 0.0
        %757 = vmatprep.subr.mxu0 0.0
        %758 = vmatpush1.msra.mxu0 0.0
        %759 = vmatprep.subr.mxu0 0.0
        %760 = vmatpush1.msra.mxu0 0.0
        %761 = vmatprep.subr.mxu0 0.0
        %762 = vmatpush1.msra.mxu0 0.0
        %763 = vmatprep.subr.mxu0 0.0
        %764 = vmatpush1.msra.mxu0 0.0
        %765 = vmatprep.subr.mxu0 0.0
        %766 = vmatpush1.msra.mxu0 0.0
        %767 = vmatprep.mubr.f32.mxu0 0.0
        %768 = vmatmul.mubr.f32.gmra.mrb[0].mxu0 %v664
        %v769 = vpop.f32.mrb[0].mxu0
        %v770 = vadd.f32 %v701, %v769
        %v771 = vpop.f32.mrb[0].mxu0
        %772 = vmatprep.mubr.f32.mxu0 0.0
        %773 = vmatmul.mubr.f32.gmra.mrb[0].mxu0 %v665
        %v774 = vpop.f32.mrb[0].mxu0
        %v775 = vadd.f32 %v701, %v774
        %v776 = vpop.f32.mrb[0].mxu0
        %777 = vmatprep.mubr.f32.mxu0 0.0
        %778 = vmatmul.mubr.f32.gmra.mrb[0].mxu0 %v666
        %v779 = vpop.f32.mrb[0].mxu0
        %v780 = vadd.f32 %v701, %v779
        %v781 = vpop.f32.mrb[0].mxu0
        %782 = vmatprep.mubr.f32.mxu0 0.0
        %783 = vmatmul.mubr.f32.gmra.mrb[0].mxu0 %v667
        %v784 = vpop.f32.mrb[0].mxu0
        %v785 = vadd.f32 %v701, %v784
        %v786 = vpop.f32.mrb[0].mxu0
        %787 = vmatprep.mubr.f32.mxu0 0.0
        %788 = vmatmul.mubr.f32.gmra.mrb[0].mxu0 %v668
        %v789 = vpop.f32.mrb[0].mxu0
        %v790 = vadd.f32 %v701, %v789
        %v791 = vpop.f32.mrb[0].mxu0
        %792 = vmatprep.mubr.f32.mxu0 0.0
        %793 = vmatmul.mubr.f32.gmra.mrb[0].mxu0 %v669
        %v794 = vpop.f32.mrb[0].mxu0
        %v795 = vadd.f32 %v701, %v794
        %v796 = vpop.f32.mrb[0].mxu0
        %797 = vmatprep.mubr.f32.mxu0 0.0
        %798 = vmatmul.mubr.f32.gmra.mrb[0].mxu0 %v670
        %v799 = vpop.f32.mrb[0].mxu0
        %v800 = vadd.f32 %v701, %v799
        %v801 = vpop.f32.mrb[0].mxu0
        %802 = vmatprep.mubr.f32.mxu0 0.0
        %803 = vmatmul.mubr.f32.gmra.mrb[0].mxu0 %v671
        %v804 = vpop.f32.mrb[0].mxu0
        %v805 = vadd.f32 %v701, %v804
        %v806 = vpop.f32.mrb[0].mxu0
        %807 = vmatprep.mubr.f32.mxu0 0.0
        %808 = vmatmul.mubr.f32.gmra.mrb[0].mxu0 %v672
        %v809 = vpop.f32.mrb[0].mxu0
        %v810 = vadd.f32 %v701, %v809
        %v811 = vpop.f32.mrb[0].mxu0
        %812 = vmatprep.mubr.f32.mxu0 0.0
        %813 = vmatmul.mubr.f32.gmra.mrb[0].mxu0 %v673
        %v814 = vpop.f32.mrb[0].mxu0
        %v815 = vadd.f32 %v701, %v814
        %v816 = vpop.f32.mrb[0].mxu0
        %817 = vmatprep.mubr.f32.mxu0 0.0
        %818 = vmatmul.mubr.f32.gmra.mrb[0].mxu0 %v674
        %v819 = vpop.f32.mrb[0].mxu0
        %v820 = vadd.f32 %v701, %v819
        %v821 = vpop.f32.mrb[0].mxu0
        %822 = vmatprep.mubr.f32.mxu0 0.0
        %823 = vmatmul.mubr.f32.gmra.mrb[0].mxu0 %v675
        %v824 = vpop.f32.mrb[0].mxu0
        %v825 = vadd.f32 %v701, %v824
        %v826 = vpop.f32.mrb[0].mxu0
        %827 = vmatprep.mubr.f32.mxu0 0.0
        %828 = vmatmul.mubr.f32.gmra.mrb[0].mxu0 %v676
        %v829 = vpop.f32.mrb[0].mxu0
        %v830 = vadd.f32 %v701, %v829
        %v831 = vpop.f32.mrb[0].mxu0
        %832 = vmatprep.mubr.f32.mxu0 0.0
        %833 = vmatmul.mubr.f32.gmra.mrb[0].mxu0 %v677
        %v834 = vpop.f32.mrb[0].mxu0
        %v835 = vadd.f32 %v701, %v834
        %v836 = vpop.f32.mrb[0].mxu0
        %837 = vmatprep.mubr.f32.mxu0 0.0
        %838 = vmatmul.mubr.f32.gmra.mrb[0].mxu0 %v678
        %v839 = vpop.f32.mrb[0].mxu0
        %v840 = vadd.f32 %v701, %v839
        %v841 = vpop.f32.mrb[0].mxu0
        %842 = vmatprep.mubr.f32.mxu0 0.0
        %843 = vmatmul.mubr.f32.gmra.mrb[0].mxu0 %v679
        %v844 = vpop.f32.mrb[0].mxu0
        %v845 = vadd.f32 %v701, %v844
        %v846 = vpop.f32.mrb[0].mxu0
        %847 = vdwg.mxu0
        %v848 = vmax.f32 %v770, 0.0
        %v849 = vmax.f32 %v775, 0.0
        %v850 = vmax.f32 %v780, 0.0
        %v851 = vmax.f32 %v785, 0.0
        %v852 = vmax.f32 %v790, 0.0
        %v853 = vmax.f32 %v795, 0.0
        %v854 = vmax.f32 %v800, 0.0
        %v855 = vmax.f32 %v805, 0.0
        %v856 = vmax.f32 %v810, 0.0
        %v857 = vmax.f32 %v815, 0.0
        %v858 = vmax.f32 %v820, 0.0
        %v859 = vmax.f32 %v825, 0.0
        %v860 = vmax.f32 %v830, 0.0
        %v861 = vmax.f32 %v835, 0.0
        %v862 = vmax.f32 %v840, 0.0
        %v863 = vmax.f32 %v845, 0.0
        %v864 = vld [vmem:[%s5] sm:$0xff]
        %v865 = vld [vmem:[%s5 + $0x8] sm:$0xff]
        %v866 = vld [vmem:[%s5 + $0x10] sm:$0xff]
        %v867 = vld [vmem:[%s5 + $0x18] sm:$0xff]
        %v868 = vld [vmem:[%s5 + $0x20] sm:$0xff]
        %v869 = vld [vmem:[%s5 + $0x28] sm:$0xff]
        %v870 = vld [vmem:[%s5 + $0x30] sm:$0xff]
        %v871 = vld [vmem:[%s5 + $0x38] sm:$0xff]
        %vm872 = vcmask 523264
        %v874 = vsel %vm872, %v848, 0
        %v877 = vsel %vm872, %v849, 0
        %v880 = vsel %vm872, %v850, 0
        %v883 = vsel %vm872, %v851, 0
        %v886 = vsel %vm872, %v852, 0
        %v889 = vsel %vm872, %v853, 0
        %v892 = vsel %vm872, %v854, 0
        %v895 = vsel %vm872, %v855, 0
        %v898 = vsel %vm872, %v856, 0
        %v901 = vsel %vm872, %v857, 0
        %v904 = vsel %vm872, %v858, 0
        %v907 = vsel %vm872, %v859, 0
        %v910 = vsel %vm872, %v860, 0
        %v913 = vsel %vm872, %v861, 0
        %v916 = vsel %vm872, %v862, 0
        %v919 = vsel %vm872, %v863, 0
        %921 = vmatprep.subr.mxu0 0.0
        %922 = vmatpush1.msra.mxu0 %v864
        %923 = vmatprep.subr.mxu0 0.0
        %924 = vmatpush1.msra.mxu0 %v865
        %925 = vmatprep.subr.mxu0 0.0
        %926 = vmatpush1.msra.mxu0 %v866
        %927 = vmatprep.subr.mxu0 0.0
        %928 = vmatpush1.msra.mxu0 %v867
        %929 = vmatprep.subr.mxu0 0.0
        %930 = vmatpush1.msra.mxu0 %v868
        %931 = vmatprep.subr.mxu0 0.0
        %932 = vmatpush1.msra.mxu0 %v869
        %933 = vmatprep.subr.mxu0 0.0
        %934 = vmatpush1.msra.mxu0 %v870
        %935 = vmatprep.subr.mxu0 0.0
        %936 = vmatpush1.msra.mxu0 %v871
        %937 = vmatprep.subr.mxu0 0.0
        %938 = vmatpush1.msra.mxu0 0.0
        %939 = vmatprep.subr.mxu0 0.0
        %940 = vmatpush1.msra.mxu0 0.0
        %941 = vmatprep.subr.mxu0 0.0
        %942 = vmatpush1.msra.mxu0 0.0
        %943 = vmatprep.subr.mxu0 0.0
        %944 = vmatpush1.msra.mxu0 0.0
        %945 = vmatprep.subr.mxu0 0.0
        %946 = vmatpush1.msra.mxu0 0.0
        %947 = vmatprep.subr.mxu0 0.0
        %948 = vmatpush1.msra.mxu0 0.0
        %949 = vmatprep.subr.mxu0 0.0
        %950 = vmatpush1.msra.mxu0 0.0
        %951 = vmatprep.subr.mxu0 0.0
        %952 = vmatpush1.msra.mxu0 0.0
        %953 = vmatprep.subr.mxu0 0.0
        %954 = vmatpush1.msra.mxu0 0.0
        %955 = vmatprep.subr.mxu0 0.0
        %956 = vmatpush1.msra.mxu0 0.0
        %957 = vmatprep.subr.mxu0 0.0
        %958 = vmatpush1.msra.mxu0 0.0
        %959 = vmatprep.subr.mxu0 0.0
        %960 = vmatpush1.msra.mxu0 0.0
        %961 = vmatprep.subr.mxu0 0.0
        %962 = vmatpush1.msra.mxu0 0.0
        %963 = vmatprep.subr.mxu0 0.0
        %964 = vmatpush1.msra.mxu0 0.0
        %965 = vmatprep.subr.mxu0 0.0
        %966 = vmatpush1.msra.mxu0 0.0
        %967 = vmatprep.subr.mxu0 0.0
        %968 = vmatpush1.msra.mxu0 0.0
        %969 = vmatprep.subr.mxu0 0.0
        %970 = vmatpush1.msra.mxu0 0.0
        %971 = vmatprep.subr.mxu0 0.0
        %972 = vmatpush1.msra.mxu0 0.0
        %973 = vmatprep.subr.mxu0 0.0
        %974 = vmatpush1.msra.mxu0 0.0
        %975 = vmatprep.subr.mxu0 0.0
        %976 = vmatpush1.msra.mxu0 0.0
        %977 = vmatprep.subr.mxu0 0.0
        %978 = vmatpush1.msra.mxu0 0.0
        %979 = vmatprep.subr.mxu0 0.0
        %980 = vmatpush1.msra.mxu0 0.0
        %981 = vmatprep.subr.mxu0 0.0
        %982 = vmatpush1.msra.mxu0 0.0
        %983 = vmatprep.subr.mxu0 0.0
        %984 = vmatpush1.msra.mxu0 0.0
        %985 = vmatprep.mubr.f32.mxu0 0.0
        %986 = vmatmul.mubr.f32.gmra.mrb[0].mxu0 %v874
        %v987 = vpop.f32.mrb[0].mxu0
        %v988 = vadd.f32 0.0, %v987
        %v989 = vpop.f32.mrb[0].mxu0
        %990 = vmatprep.mubr.f32.mxu0 0.0
        %991 = vmatmul.mubr.f32.gmra.mrb[0].mxu0 %v877
        %v992 = vpop.f32.mrb[0].mxu0
        %v993 = vadd.f32 0.0, %v992
        %v994 = vpop.f32.mrb[0].mxu0
        %995 = vmatprep.mubr.f32.mxu0 0.0
        %996 = vmatmul.mubr.f32.gmra.mrb[0].mxu0 %v880
        %v997 = vpop.f32.mrb[0].mxu0
        %v998 = vadd.f32 0.0, %v997
        %v999 = vpop.f32.mrb[0].mxu0
        %1000 = vmatprep.mubr.f32.mxu0 0.0
        %1001 = vmatmul.mubr.f32.gmra.mrb[0].mxu0 %v883
        %v1002 = vpop.f32.mrb[0].mxu0
        %v1003 = vadd.f32 0.0, %v1002
        %v1004 = vpop.f32.mrb[0].mxu0
        %1005 = vmatprep.mubr.f32.mxu0 0.0
        %1006 = vmatmul.mubr.f32.gmra.mrb[0].mxu0 %v886
        %v1007 = vpop.f32.mrb[0].mxu0
        %v1008 = vadd.f32 0.0, %v1007
        %v1009 = vpop.f32.mrb[0].mxu0
        %1010 = vmatprep.mubr.f32.mxu0 0.0
        %1011 = vmatmul.mubr.f32.gmra.mrb[0].mxu0 %v889
        %v1012 = vpop.f32.mrb[0].mxu0
        %v1013 = vadd.f32 0.0, %v1012
        %v1014 = vpop.f32.mrb[0].mxu0
        %1015 = vmatprep.mubr.f32.mxu0 0.0
        %1016 = vmatmul.mubr.f32.gmra.mrb[0].mxu0 %v892
        %v1017 = vpop.f32.mrb[0].mxu0
        %v1018 = vadd.f32 0.0, %v1017
        %v1019 = vpop.f32.mrb[0].mxu0
        %1020 = vmatprep.mubr.f32.mxu0 0.0
        %1021 = vmatmul.mubr.f32.gmra.mrb[0].mxu0 %v895
        %v1022 = vpop.f32.mrb[0].mxu0
        %v1023 = vadd.f32 0.0, %v1022
        %v1024 = vpop.f32.mrb[0].mxu0
        %1025 = vmatprep.mubr.f32.mxu0 0.0
        %1026 = vmatmul.mubr.f32.gmra.mrb[0].mxu0 %v898
        %v1027 = vpop.f32.mrb[0].mxu0
        %v1028 = vadd.f32 0.0, %v1027
        %v1029 = vpop.f32.mrb[0].mxu0
        %1030 = vmatprep.mubr.f32.mxu0 0.0
        %1031 = vmatmul.mubr.f32.gmra.mrb[0].mxu0 %v901
        %v1032 = vpop.f32.mrb[0].mxu0
        %v1033 = vadd.f32 0.0, %v1032
        %v1034 = vpop.f32.mrb[0].mxu0
        %1035 = vmatprep.mubr.f32.mxu0 0.0
        %1036 = vmatmul.mubr.f32.gmra.mrb[0].mxu0 %v904
        %v1037 = vpop.f32.mrb[0].mxu0
        %v1038 = vadd.f32 0.0, %v1037
        %v1039 = vpop.f32.mrb[0].mxu0
        %1040 = vmatprep.mubr.f32.mxu0 0.0
        %1041 = vmatmul.mubr.f32.gmra.mrb[0].mxu0 %v907
        %v1042 = vpop.f32.mrb[0].mxu0
        %v1043 = vadd.f32 0.0, %v1042
        %v1044 = vpop.f32.mrb[0].mxu0
        %1045 = vmatprep.mubr.f32.mxu0 0.0
        %1046 = vmatmul.mubr.f32.gmra.mrb[0].mxu0 %v910
        %v1047 = vpop.f32.mrb[0].mxu0
        %v1048 = vadd.f32 0.0, %v1047
        %v1049 = vpop.f32.mrb[0].mxu0
        %1050 = vmatprep.mubr.f32.mxu0 0.0
        %1051 = vmatmul.mubr.f32.gmra.mrb[0].mxu0 %v913
        %v1052 = vpop.f32.mrb[0].mxu0
        %v1053 = vadd.f32 0.0, %v1052
        %v1054 = vpop.f32.mrb[0].mxu0
        %1055 = vmatprep.mubr.f32.mxu0 0.0
        %1056 = vmatmul.mubr.f32.gmra.mrb[0].mxu0 %v916
        %v1057 = vpop.f32.mrb[0].mxu0
        %v1058 = vadd.f32 0.0, %v1057
        %v1059 = vpop.f32.mrb[0].mxu0
        %1060 = vmatprep.mubr.f32.mxu0 0.0
        %1061 = vmatmul.mubr.f32.gmra.mrb[0].mxu0 %v919
        %v1062 = vpop.f32.mrb[0].mxu0
        %v1063 = vadd.f32 0.0, %v1062
        %v1064 = vpop.f32.mrb[0].mxu0
        %1065 = vdwg.mxu0
        %vm1066 = vcmask 7168
        %1067 = vst.msk [vmem:[%s253] sm:$0xff] %vm1066, %v988
        %1068 = vst.msk [vmem:[%s253 + $0x8] sm:$0xff] %vm1066, %v993
        %1069 = vst.msk [vmem:[%s253 + $0x10] sm:$0xff] %vm1066, %v998
        %1070 = vst.msk [vmem:[%s253 + $0x18] sm:$0xff] %vm1066, %v1003
        %1071 = vst.msk [vmem:[%s253 + $0x20] sm:$0xff] %vm1066, %v1008
        %1072 = vst.msk [vmem:[%s253 + $0x28] sm:$0xff] %vm1066, %v1013
        %1073 = vst.msk [vmem:[%s253 + $0x30] sm:$0xff] %vm1066, %v1018
        %1074 = vst.msk [vmem:[%s253 + $0x38] sm:$0xff] %vm1066, %v1023
        %1075 = vst.msk [vmem:[%s253 + $0x40] sm:$0xff] %vm1066, %v1028
        %1076 = vst.msk [vmem:[%s253 + $0x48] sm:$0xff] %vm1066, %v1033
        %1077 = vst.msk [vmem:[%s253 + $0x50] sm:$0xff] %vm1066, %v1038
        %1078 = vst.msk [vmem:[%s253 + $0x58] sm:$0xff] %vm1066, %v1043
        %1079 = vst.msk [vmem:[%s253 + $0x60] sm:$0xff] %vm1066, %v1048
        %1080 = vst.msk [vmem:[%s253 + $0x68] sm:$0xff] %vm1066, %v1053
        %1081 = vst.msk [vmem:[%s253 + $0x70] sm:$0xff] %vm1066, %v1058
        %1082 = vst.msk [vmem:[%s253 + $0x78] sm:$0xff] %vm1066, %v1063
        %s1083 = sand.u32 %s156, 1
        %s1084 = sand.u32 %s156, 1
        %s1085 = smul.addr %s1084, 128
        %s1086 = scalar_lea.vmem [#allocation2], %s1085
        // Predicated region
        $region45: #{cross_dimensional_attention.1} parent=43 // pred_check
          %p1087 = pneg %p166
        $region46: #{cross_dimensional_attention.1} parent=43 // pred_check_branch
          %1089 = sbr.rel (%p1087) target = $region48
        $region47: #{cross_dimensional_attention.1} parent=43 // pred_region
          %s1090 = smul.u32 16, %s17
          %s1091 = ssub.s32 25, %s1090
          %p1092 = scmp.lt.s32.totalorder %s1091, 16
          %s1093 = scalar_select %p1092, %s1091, 16
          %s1094 = smul.u32 128, %s1093
          %p1095 = scmp.ne.s32.totalorder 0, %s1094
          %s1096 = smul.addr %s1090, 8
          %s1097 = scalar_lea.vmem %s6, %s1096
          // Predicated region
          $region49: #{cross_dimensional_attention.1} parent=47 // pred_check
            %p1098 = pneg %p1095
          $region50: #{cross_dimensional_attention.1} parent=47 // pred_check_branch
            %1100 = sbr.rel (%p1098) target = $region52
          $region51: #{cross_dimensional_attention.1} parent=47 // pred_region
            // Predicated region
            $region53: #{cross_dimensional_attention.1} parent=51 // pred_check
              _
            $region54: #{cross_dimensional_attention.1} parent=51 // pred_check_branch
              %1102 = sbr.rel (0) target = $region56
            $region55: #{cross_dimensional_attention.1} parent=51 // pred_region
              // Predicated region
              $region75: #{cross_dimensional_attention.1} parent=55 // pred_check
                _
              $region76: #{cross_dimensional_attention.1} parent=55 // pred_check_branch
                %1181 = sbr.rel (0) target = $region78
              $region77: #{cross_dimensional_attention.1} parent=55 // pred_region
                %s1182 = sshrl.u32 %s1093, 4
                // While loop
                $region79: #{cross_dimensional_attention.1} parent=77 // loop_pre_header
                  _
                $region80: #{cross_dimensional_attention.1} parent=77 // loop_header
                  %s1184 = sphi 0, %s1186
                  %p1185 = scmp.ge.s32.totalorder %s1184, %s1182
                  %s1189 = sphi 0, %s1226
                  %s1190 = sphi %s1086, %s1229
                  %s1191 = sphi %s1097, %s1230
                $region81: #{cross_dimensional_attention.1} parent=77 // loop_header_branch
                  %1188 = sbr.rel (%p1185) target = $region85
                $region82: #{cross_dimensional_attention.1} parent=77 // loop_body
                  %v1192 = vld [vmem:[%s1190] sm:$0xff]
                  %1193 = vst [vmem:[%s1191] sm:$0xff] %v1192
                  %v1194 = vld [vmem:[%s1190 + $0x8] sm:$0xff]
                  %1195 = vst [vmem:[%s1191 + $0x8] sm:$0xff] %v1194
                  %v1196 = vld [vmem:[%s1190 + $0x10] sm:$0xff]
                  %1197 = vst [vmem:[%s1191 + $0x10] sm:$0xff] %v1196
                  %v1198 = vld [vmem:[%s1190 + $0x18] sm:$0xff]
                  %1199 = vst [vmem:[%s1191 + $0x18] sm:$0xff] %v1198
                  %v1200 = vld [vmem:[%s1190 + $0x20] sm:$0xff]
                  %1201 = vst [vmem:[%s1191 + $0x20] sm:$0xff] %v1200
                  %v1202 = vld [vmem:[%s1190 + $0x28] sm:$0xff]
                  %1203 = vst [vmem:[%s1191 + $0x28] sm:$0xff] %v1202
                  %v1204 = vld [vmem:[%s1190 + $0x30] sm:$0xff]
                  %1205 = vst [vmem:[%s1191 + $0x30] sm:$0xff] %v1204
                  %v1206 = vld [vmem:[%s1190 + $0x38] sm:$0xff]
                  %1207 = vst [vmem:[%s1191 + $0x38] sm:$0xff] %v1206
                  %v1208 = vld [vmem:[%s1190 + $0x40] sm:$0xff]
                  %1209 = vst [vmem:[%s1191 + $0x40] sm:$0xff] %v1208
                  %v1210 = vld [vmem:[%s1190 + $0x48] sm:$0xff]
                  %1211 = vst [vmem:[%s1191 + $0x48] sm:$0xff] %v1210
                  %v1212 = vld [vmem:[%s1190 + $0x50] sm:$0xff]
                  %1213 = vst [vmem:[%s1191 + $0x50] sm:$0xff] %v1212
                  %v1214 = vld [vmem:[%s1190 + $0x58] sm:$0xff]
                  %1215 = vst [vmem:[%s1191 + $0x58] sm:$0xff] %v1214
                  %v1216 = vld [vmem:[%s1190 + $0x60] sm:$0xff]
                  %1217 = vst [vmem:[%s1191 + $0x60] sm:$0xff] %v1216
                  %v1218 = vld [vmem:[%s1190 + $0x68] sm:$0xff]
                  %1219 = vst [vmem:[%s1191 + $0x68] sm:$0xff] %v1218
                  %v1220 = vld [vmem:[%s1190 + $0x70] sm:$0xff]
                  %1221 = vst [vmem:[%s1191 + $0x70] sm:$0xff] %v1220
                  %v1222 = vld [vmem:[%s1190 + $0x78] sm:$0xff]
                  %1223 = vst [vmem:[%s1191 + $0x78] sm:$0xff] %v1222
                  %s1224 = sadd.s32 1, %s1189
                  %p1225 = scmp.ge.s32.totalorder %s1224, %s1182
                  %s1226 = scalar_select %p1225, 0, %s1224
                  %s1227 = smul.u32 %s1226, 128
                  %s1228 = smul.u32 %s1226, 128
                  %s1229 = scalar_lea.vmem %s1086, %s1227 [#allocation2]
                  %s1230 = scalar_lea.vmem %s1097, %s1228
                $region83: #{cross_dimensional_attention.1} parent=77 // loop_footer
                  %s1186 = sadd.s32 %s1184, 1
                $region84: #{cross_dimensional_attention.1} parent=77 // loop_footer_branch
                  %1183 = sbr.rel target = $region80
                $region85: #{cross_dimensional_attention.1} parent=77 // loop_exit
                  _
                %s1231 = sshrl.u32 %s1093, 4
                %s1232 = sand.u32 %s1093, 15
                %s1233 = smul.u32 %s1231, 16
                %s1234 = smul.u32 8, %s1233
                %s1235 = scalar_lea.vmem %s1086, %s1234 [#allocation2]
                %s1236 = smul.u32 8, %s1233
                %s1237 = scalar_lea.vmem %s1097, %s1236
                // While loop
                $region86: #{cross_dimensional_attention.1} parent=77 // loop_pre_header
                  _
                $region87: #{cross_dimensional_attention.1} parent=77 // loop_header
                  %s1239 = sphi 0, %s1241
                  %p1240 = scmp.ge.s32.totalorder %s1239, %s1232
                  %s1244 = sphi 0, %s1251
                  %s1245 = sphi %s1235, %s1254
                  %s1246 = sphi %s1237, %s1255
                $region88: #{cross_dimensional_attention.1} parent=77 // loop_header_branch
                  %1243 = sbr.rel (%p1240) target = $region92
                $region89: #{cross_dimensional_attention.1} parent=77 // loop_body
                  %v1247 = vld [vmem:[%s1245] sm:$0xff]
                  %1248 = vst [vmem:[%s1246] sm:$0xff] %v1247
                  %s1249 = sadd.s32 1, %s1244
                  %p1250 = scmp.ge.s32.totalorder %s1249, %s1232
                  %s1251 = scalar_select %p1250, 0, %s1249
                  %s1252 = smul.u32 %s1251, 8
                  %s1253 = smul.u32 %s1251, 8
                  %s1254 = scalar_lea.vmem %s1235, %s1252 [#allocation2]
                  %s1255 = scalar_lea.vmem %s1237, %s1253
                $region90: #{cross_dimensional_attention.1} parent=77 // loop_footer
                  %s1241 = sadd.s32 %s1239, 1
                $region91: #{cross_dimensional_attention.1} parent=77 // loop_footer_branch
                  %1238 = sbr.rel target = $region87
                $region92: #{cross_dimensional_attention.1} parent=77 // loop_exit
                  _
              $region78: #{cross_dimensional_attention.1} parent=55 // pred_fallthru
                _
              // Predicated region
              $region93: #{cross_dimensional_attention.1} parent=55 // pred_check
                _
              $region94: #{cross_dimensional_attention.1} parent=55 // pred_check_branch
                %1257 = sbr.rel target = $region96
              $region95: #{cross_dimensional_attention.1} parent=55 // pred_region
                _
              $region96: #{cross_dimensional_attention.1} parent=55 // pred_fallthru
                _
            $region56: #{cross_dimensional_attention.1} parent=51 // pred_fallthru
              _
            // Predicated region
            $region57: #{cross_dimensional_attention.1} parent=51 // pred_check
              _
            $region58: #{cross_dimensional_attention.1} parent=51 // pred_check_branch
              %1104 = sbr.rel target = $region60
            $region59: #{cross_dimensional_attention.1} parent=51 // pred_region
              %s1106 = sshrl.u32 %s1093, 4
              // While loop
              $region61: #{cross_dimensional_attention.1} parent=59 // loop_pre_header
                _
              $region62: #{cross_dimensional_attention.1} parent=59 // loop_header
                %s1108 = sphi 0, %s1110
                %p1109 = scmp.ge.s32.totalorder %s1108, %s1106
                %s1113 = sphi 0, %s1150
                %s1114 = sphi %s1086, %s1153
                %s1115 = sphi %s1097, %s1154
              $region63: #{cross_dimensional_attention.1} parent=59 // loop_header_branch
                %1112 = sbr.rel (%p1109) target = $region67
              $region64: #{cross_dimensional_attention.1} parent=59 // loop_body
                %v1116 = vld [vmem:[%s1114] sm:$0xff]
                %1117 = vst [vmem:[%s1115] sm:$0xff] %v1116
                %v1118 = vld [vmem:[%s1114 + $0x8] sm:$0xff]
                %1119 = vst [vmem:[%s1115 + $0x8] sm:$0xff] %v1118
                %v1120 = vld [vmem:[%s1114 + $0x10] sm:$0xff]
                %1121 = vst [vmem:[%s1115 + $0x10] sm:$0xff] %v1120
                %v1122 = vld [vmem:[%s1114 + $0x18] sm:$0xff]
                %1123 = vst [vmem:[%s1115 + $0x18] sm:$0xff] %v1122
                %v1124 = vld [vmem:[%s1114 + $0x20] sm:$0xff]
                %1125 = vst [vmem:[%s1115 + $0x20] sm:$0xff] %v1124
                %v1126 = vld [vmem:[%s1114 + $0x28] sm:$0xff]
                %1127 = vst [vmem:[%s1115 + $0x28] sm:$0xff] %v1126
                %v1128 = vld [vmem:[%s1114 + $0x30] sm:$0xff]
                %1129 = vst [vmem:[%s1115 + $0x30] sm:$0xff] %v1128
                %v1130 = vld [vmem:[%s1114 + $0x38] sm:$0xff]
                %1131 = vst [vmem:[%s1115 + $0x38] sm:$0xff] %v1130
                %v1132 = vld [vmem:[%s1114 + $0x40] sm:$0xff]
                %1133 = vst [vmem:[%s1115 + $0x40] sm:$0xff] %v1132
                %v1134 = vld [vmem:[%s1114 + $0x48] sm:$0xff]
                %1135 = vst [vmem:[%s1115 + $0x48] sm:$0xff] %v1134
                %v1136 = vld [vmem:[%s1114 + $0x50] sm:$0xff]
                %1137 = vst [vmem:[%s1115 + $0x50] sm:$0xff] %v1136
                %v1138 = vld [vmem:[%s1114 + $0x58] sm:$0xff]
                %1139 = vst [vmem:[%s1115 + $0x58] sm:$0xff] %v1138
                %v1140 = vld [vmem:[%s1114 + $0x60] sm:$0xff]
                %1141 = vst [vmem:[%s1115 + $0x60] sm:$0xff] %v1140
                %v1142 = vld [vmem:[%s1114 + $0x68] sm:$0xff]
                %1143 = vst [vmem:[%s1115 + $0x68] sm:$0xff] %v1142
                %v1144 = vld [vmem:[%s1114 + $0x70] sm:$0xff]
                %1145 = vst [vmem:[%s1115 + $0x70] sm:$0xff] %v1144
                %v1146 = vld [vmem:[%s1114 + $0x78] sm:$0xff]
                %1147 = vst [vmem:[%s1115 + $0x78] sm:$0xff] %v1146
                %s1148 = sadd.s32 1, %s1113
                %p1149 = scmp.ge.s32.totalorder %s1148, %s1106
                %s1150 = scalar_select %p1149, 0, %s1148
                %s1151 = smul.u32 %s1150, 128
                %s1152 = smul.u32 %s1150, 128
                %s1153 = scalar_lea.vmem %s1086, %s1151 [#allocation2]
                %s1154 = scalar_lea.vmem %s1097, %s1152
              $region65: #{cross_dimensional_attention.1} parent=59 // loop_footer
                %s1110 = sadd.s32 %s1108, 1
              $region66: #{cross_dimensional_attention.1} parent=59 // loop_footer_branch
                %1107 = sbr.rel target = $region62
              $region67: #{cross_dimensional_attention.1} parent=59 // loop_exit
                _
              %s1155 = sshrl.u32 %s1093, 4
              %s1156 = sand.u32 %s1093, 15
              %s1157 = smul.u32 %s1155, 16
              %s1158 = smul.u32 8, %s1157
              %s1159 = scalar_lea.vmem %s1086, %s1158 [#allocation2]
              %s1160 = smul.u32 8, %s1157
              %s1161 = scalar_lea.vmem %s1097, %s1160
              // While loop
              $region68: #{cross_dimensional_attention.1} parent=59 // loop_pre_header
                _
              $region69: #{cross_dimensional_attention.1} parent=59 // loop_header
                %s1163 = sphi 0, %s1165
                %p1164 = scmp.ge.s32.totalorder %s1163, %s1156
                %s1168 = sphi 0, %s1175
                %s1169 = sphi %s1159, %s1178
                %s1170 = sphi %s1161, %s1179
              $region70: #{cross_dimensional_attention.1} parent=59 // loop_header_branch
                %1167 = sbr.rel (%p1164) target = $region74
              $region71: #{cross_dimensional_attention.1} parent=59 // loop_body
                %v1171 = vld [vmem:[%s1169] sm:$0xff]
                %1172 = vst [vmem:[%s1170] sm:$0xff] %v1171
                %s1173 = sadd.s32 1, %s1168
                %p1174 = scmp.ge.s32.totalorder %s1173, %s1156
                %s1175 = scalar_select %p1174, 0, %s1173
                %s1176 = smul.u32 %s1175, 8
                %s1177 = smul.u32 %s1175, 8
                %s1178 = scalar_lea.vmem %s1159, %s1176 [#allocation2]
                %s1179 = scalar_lea.vmem %s1161, %s1177
              $region72: #{cross_dimensional_attention.1} parent=59 // loop_footer
                %s1165 = sadd.s32 %s1163, 1
              $region73: #{cross_dimensional_attention.1} parent=59 // loop_footer_branch
                %1162 = sbr.rel target = $region69
              $region74: #{cross_dimensional_attention.1} parent=59 // loop_exit
                _
            $region60: #{cross_dimensional_attention.1} parent=51 // pred_fallthru
              _
          $region52: #{cross_dimensional_attention.1} parent=47 // pred_fallthru
            _
          %1258 = vnop
        $region48: #{cross_dimensional_attention.1} parent=43 // pred_fallthru
          _
      $region44: #{cross_dimensional_attention.1} parent=5 // pred_fallthru
        _
      %p1259 = scmp.le.s32.totalorder 2, %s12
      // Predicated region
      $region97: #{cross_dimensional_attention.1} parent=5 // pred_check
        %p1260 = pneg %p1259
      $region98: #{cross_dimensional_attention.1} parent=5 // pred_check_branch
        %1262 = sbr.rel (%p1260) target = $region100
      $region99: #{cross_dimensional_attention.1} parent=5 // pred_region
        %s1263 = ssub.s32 %s12, 2
        // Predicated region
        $region101: #{cross_dimensional_attention.1} parent=99 // pred_check
          %p1264 = pneg %p172
        $region102: #{cross_dimensional_attention.1} parent=99 // pred_check_branch
          %1266 = sbr.rel (%p1264) target = $region104
        $region103: #{cross_dimensional_attention.1} parent=99 // pred_region
          %s1267 = sand.u32 %s157, 1
          %s1268 = sand.u32 %s157, 1
          %s1269 = smul.addr %s1268, 128
          %s1270 = scalar_lea.vmem [#allocation2], %s1269
        $region104: #{cross_dimensional_attention.1} parent=99 // pred_fallthru
          _
      $region100: #{cross_dimensional_attention.1} parent=5 // pred_fallthru
        _
    $region6: #{cross_dimensional_attention.1} parent=1 // loop_footer
      %s16 = sadd.s32 1, %s12
    $region7: #{cross_dimensional_attention.1} parent=1 // loop_footer_branch
      %11 = sbr.rel target = $region3
    $region8: #{cross_dimensional_attention.1} parent=1 // loop_exit
      _

</llo_original>
